<compile_context>
chip_gen: v7x
topology: tpu7x:2x2x1
jax: 0.10.0
libtpu: 0.0.40
codegen_flags: <defaults>
</compile_context>

<pallas_src>
from functools import partial

import jax
import jax.numpy as jnp
from jax.experimental import pallas as pl
from jax.experimental.pallas import tpu as pltpu


def _tpu_is_v5():
    try:
        kind = jax.devices()[0].device_kind.lower()
    except Exception:
        return False
    return "v5" in kind


def combined_kernel(feat_ref, x_ref,
                    w1_ref, w2_ref, b2_ref, w3_ref, b3_ref,
                    w4_ref, b4_ref, w5_ref, b5_ref,
                    out_ref, *, act_dtype):
    slope = jnp.asarray(0.01, act_dtype)   # nn.LeakyReLU default negative_slope

    def act(h_f32):
        # max-form leaky ReLU (2 VPU ops) in act_dtype (bf16 on v6e/v7x, f32 on v5e)
        m = h_f32.astype(act_dtype)
        return jnp.maximum(m, m * slope)

    def layer(w_ref, h, b_ref=None):
        # (out, in) @ (in, T) -> (out, T), f32 accumulation on the MXU
        o = jnp.dot(w_ref[...], h.astype(jnp.bfloat16),
                    preferred_element_type=jnp.float32)
        return o if b_ref is None else o + b_ref[...]

    f = feat_ref[...]                                   # (18, T) bf16, row 17 == 1.0 (folds b1)
    h = act(layer(w1_ref, f))                           # (128, T), bias folded into W1
    h = act(layer(w2_ref, h, b2_ref))                   # (64, T)
    h = act(layer(w3_ref, h, b3_ref))                   # (32, T)
    h = act(layer(w4_ref, h, b4_ref))                   # (32, T)
    ab = layer(w5_ref, h, b5_ref)                       # (2, T) f32

    A = ab[0:1, :]
    B = jnp.maximum(ab[1:2, :], jnp.float32(1e-10))     # clamp is part of the PyTorch spec
    x = x_ref[...]                                      # (1, T) f32
    # A * x ** B via EUP log/exp; with B > 0 this matches torch.pow for x >= 0.
    out_ref[...] = A * jnp.exp(B * jnp.log(x))


def _choose_tile(n, tile_n):
    n128 = pl.cdiv(n, 128) * 128
    tile = max(128, (min(int(tile_n), n128) // 128) * 128)
    # Keep >= 2 grid steps when the batch allows it (v7x megacore sharding).
    if n128 >= 256 and pl.cdiv(n128, tile) < 2:
        tile = pl.cdiv(pl.cdiv(n128, 2), 128) * 128
    return tile


def combined_model(features, x, params, *, tile_n=None):
    """features: (N, 17), x: (N,) with x >= 0 -> (N,) float32."""
    N = features.shape[0]
    is_v5 = _tpu_is_v5()
    act_dtype = jnp.float32 if is_v5 else jnp.bfloat16
    if tile_n is None:
        tile_n = 4096 if is_v5 else 8192
    tile = _choose_tile(N, tile_n)
    n_pad = pl.cdiv(N, tile) * tile
    grid = (n_pad // tile,)

    # Host-side slab prep in bf16 (halves the wrapper-side transpose traffic):
    # (18, n_pad) bf16 = 17 feature rows + a constant-1 row (folds b1 into W1).
    feats_bf = features.astype(jnp.bfloat16)                       # (N, 17)
    ones = jnp.ones((N, 1), jnp.bfloat16)
    slab_t = jnp.concatenate([feats_bf, ones], axis=1).T           # (18, N) bf16
    x_row = x.astype(jnp.float32).reshape(1, N)                    # (1, N) f32
    if n_pad != N:
        slab_t = jnp.pad(slab_t, ((0, 0), (0, n_pad - N)))
        x_row = jnp.pad(x_row, ((0, 0), (0, n_pad - N)), constant_values=1.0)  # keep log finite

    # Weights in PyTorch (out, in) layout; b1 folded into W1 as an 18th column.
    (w1, b1), (w2, b2), (w3, b3), (w4, b4), (w5, b5) = params
    w1_aug = jnp.concatenate([w1, b1.reshape(-1, 1)], axis=1).astype(jnp.bfloat16)  # (128, 18)
    weight_args = [
        w1_aug,
        w2.astype(jnp.bfloat16), b2.reshape(-1, 1).astype(jnp.float32),
        w3.astype(jnp.bfloat16), b3.reshape(-1, 1).astype(jnp.float32),
        w4.astype(jnp.bfloat16), b4.reshape(-1, 1).astype(jnp.float32),
        w5.astype(jnp.bfloat16), b5.reshape(-1, 1).astype(jnp.float32),
    ]

    in_specs = (
        [pl.BlockSpec((18, tile), lambda i: (0, i)),               # feature slab tile
         pl.BlockSpec((1, tile), lambda i: (0, i))]                # x tile
        + [pl.BlockSpec(p.shape, lambda i: (0, 0)) for p in weight_args]  # VMEM-resident
    )

    out = pl.pallas_call(
        partial(combined_kernel, act_dtype=act_dtype),
        out_shape=jax.ShapeDtypeStruct((1, n_pad), jnp.float32),
        grid=grid,
        in_specs=in_specs,
        out_specs=pl.BlockSpec((1, tile), lambda i: (0, i)),
        compiler_params=pltpu.CompilerParams(
            dimension_semantics=("parallel",),
            vmem_limit_bytes=32 * 1024 * 1024),
    )(slab_t, x_row, *weight_args)
    return out[0, :N]


def init_params(key):
    """Deterministic init; weights stored PyTorch-style (out_features, in_features)."""
    sizes = [(17, 128), (128, 64), (64, 32), (32, 32), (32, 2)]
    params = []
    for i, (fin, fout) in enumerate(sizes):
        kw, kb = jax.random.split(jax.random.fold_in(key, i))
        bound = 1.0 / jnp.sqrt(jnp.float32(fin))
        w = jax.random.uniform(kw, (fout, fin), jnp.float32, -bound, bound)
        b = jax.random.uniform(kb, (fout,), jnp.float32, -bound, bound)
        params.append((w, b))
    return params


def reference(features, x, params, act_dtype=jnp.bfloat16):
    """Mirrors the kernel math (bf16 matmul operands, f32 accumulation, b1 folded,
    act_dtype leaky-ReLU, exp/log head). PyTorch runs this f32 end-to-end, so the
    kernel carries ~bf16-level (~1e-3) relative error vs the torch model."""
    (w1, b1), (w2, b2), (w3, b3), (w4, b4), (w5, b5) = params
    slope = jnp.asarray(0.01, act_dtype)

    def act(h):
        m = h.astype(act_dtype)
        return jnp.maximum(m, m * slope)

    n = features.shape[0]
    f_aug = jnp.concatenate([features.astype(jnp.bfloat16),
                             jnp.ones((n, 1), jnp.bfloat16)], axis=1)      # (N, 18)
    w1_aug = jnp.concatenate([w1, b1.reshape(-1, 1)], axis=1).astype(jnp.bfloat16)
    h = act(jnp.dot(f_aug, w1_aug.T, preferred_element_type=jnp.float32))
    for w, b in [(w2, b2), (w3, b3), (w4, b4)]:
        h = act(jnp.dot(h.astype(jnp.bfloat16), w.astype(jnp.bfloat16).T,
                        preferred_element_type=jnp.float32) + b)
    ab = jnp.dot(h.astype(jnp.bfloat16), w5.astype(jnp.bfloat16).T,
                 preferred_element_type=jnp.float32) + b5
    A, B = ab[:, 0], jnp.maximum(ab[:, 1], jnp.float32(1e-10))
    return A * jnp.exp(B * jnp.log(x.astype(jnp.float32)))


if __name__ == "__main__":
    key = jax.random.PRNGKey(0)
    kf, kx, kp = jax.random.split(key, 3)
    params = init_params(kp)
    act_dtype = jnp.float32 if _tpu_is_v5() else jnp.bfloat16

    # Small check (pads 8 -> 128, single grid step).
    N = 8
    features = jax.random.normal(kf, (N, 17), jnp.float32)
    x = jax.random.uniform(kx, (N,), jnp.float32, 0.1, 2.0)
    out = combined_model(features, x, params)
    jax.block_until_ready(out)
    ref = reference(features, x, params, act_dtype)
    assert out.shape == (N,)
    assert jnp.allclose(out, ref, atol=1e-4, rtol=1e-3), (out, ref)

    # Multi-tile grid check (grid=(3,), exercises padding + pipelined batch tiles).
    N2 = 300
    kf2, kx2 = jax.random.split(jax.random.fold_in(key, 7))
    features2 = jax.random.normal(kf2, (N2, 17), jnp.float32)
    x2 = jax.random.uniform(kx2, (N2,), jnp.float32, 0.1, 2.0)
    out2 = combined_model(features2, x2, params, tile_n=128)
    jax.block_until_ready(out2)
    ref2 = reference(features2, x2, params, act_dtype)
    assert out2.shape == (N2,)
    assert jnp.allclose(out2, ref2, atol=1e-4, rtol=1e-3), (out2, ref2)

    # Default-tile path: tile auto-split so there are >= 2 grid steps (megacore).
    N3 = 600
    kf3, kx3 = jax.random.split(jax.random.fold_in(key, 11))
    features3 = jax.random.normal(kf3, (N3, 17), jnp.float32)
    x3 = jax.random.uniform(kx3, (N3,), jnp.float32, 0.1, 2.0)
    out3 = combined_model(features3, x3, params)
    jax.block_until_ready(out3)
    ref3 = reference(features3, x3, params, act_dtype)
    assert out3.shape == (N3,)
    assert jnp.allclose(out3, ref3, atol=1e-4, rtol=1e-3), (out3, ref3)

    print("KERNEL_OK")
</pallas_src>

<mosaic_0001>
module attributes {stable_mosaic.version = 11 : i64} {
  func.func @combined_kernel(%arg0: i32, %arg1: memref<18x128xbf16, #tpu.memory_space<vmem>>, %arg2: memref<1x128xf32, #tpu.memory_space<vmem>>, %arg3: memref<128x18xbf16, #tpu.memory_space<vmem>>, %arg4: memref<64x128xbf16, #tpu.memory_space<vmem>>, %arg5: memref<64x1xf32, #tpu.memory_space<vmem>>, %arg6: memref<32x64xbf16, #tpu.memory_space<vmem>>, %arg7: memref<32x1xf32, #tpu.memory_space<vmem>>, %arg8: memref<32x32xbf16, #tpu.memory_space<vmem>>, %arg9: memref<32x1xf32, #tpu.memory_space<vmem>>, %arg10: memref<2x32xbf16, #tpu.memory_space<vmem>>, %arg11: memref<2x1xf32, #tpu.memory_space<vmem>>, %arg12: memref<1x128xf32, #tpu.memory_space<vmem>>) attributes {dimension_semantics = [#tpu.dimension_semantics<parallel>], iteration_bounds = array<i64: 1>, scalar_prefetch = 0 : i64, scratch_operands = 0 : i64, tpu.core_type = #tpu.core_type<tc>, window_params = [{transform_indices = @transform_0, window_bounds = array<i64: 18, 128>}, {transform_indices = @transform_1, window_bounds = array<i64: 1, 128>}, {pipeline_mode = #tpu.pipeline_mode<synchronous>, transform_indices = @transform_2, window_bounds = array<i64: 128, 18>}, {pipeline_mode = #tpu.pipeline_mode<synchronous>, transform_indices = @transform_3, window_bounds = array<i64: 64, 128>}, {pipeline_mode = #tpu.pipeline_mode<synchronous>, transform_indices = @transform_4, window_bounds = array<i64: 64, 1>}, {pipeline_mode = #tpu.pipeline_mode<synchronous>, transform_indices = @transform_5, window_bounds = array<i64: 32, 64>}, {pipeline_mode = #tpu.pipeline_mode<synchronous>, transform_indices = @transform_6, window_bounds = array<i64: 32, 1>}, {pipeline_mode = #tpu.pipeline_mode<synchronous>, transform_indices = @transform_7, window_bounds = array<i64: 32, 32>}, {pipeline_mode = #tpu.pipeline_mode<synchronous>, transform_indices = @transform_8, window_bounds = array<i64: 32, 1>}, {pipeline_mode = #tpu.pipeline_mode<synchronous>, transform_indices = @transform_9, window_bounds = array<i64: 2, 32>}, {pipeline_mode = #tpu.pipeline_mode<synchronous>, transform_indices = @transform_10, window_bounds = array<i64: 2, 1>}, {transform_indices = @transform_11, window_bounds = array<i64: 1, 128>}]} {
    %c0 = arith.constant 0 : index
    %c0_0 = arith.constant 0 : index
    %0 = vector.load %arg1[%c0, %c0_0] : memref<18x128xbf16, #tpu.memory_space<vmem>>, vector<18x128xbf16>
    %c0_1 = arith.constant 0 : index
    %c0_2 = arith.constant 0 : index
    %1 = vector.load %arg3[%c0_1, %c0_2] : memref<128x18xbf16, #tpu.memory_space<vmem>>, vector<128x18xbf16>
    %cst = arith.constant dense<0.000000e+00> : vector<128x128xf32>
    %2 = tpu.matmul %1, %0, %cst {dimension_numbers = #tpu.dot_dimension_numbers<[1], [0], [0], [1], [0, 0, 1, 1], [], []>} : vector<128x18xbf16>, vector<18x128xbf16>, vector<128x128xf32> -> vector<128x128xf32>
    %3 = arith.truncf %2 : vector<128x128xf32> to vector<128x128xbf16>
    %cst_3 = arith.constant 1.000980e-02 : bf16
    %4 = vector.broadcast %cst_3 : bf16 to vector<128x128xbf16>
    %5 = arith.mulf %3, %4 : vector<128x128xbf16>
    %6 = arith.maximumf %3, %5 : vector<128x128xbf16>
    %c0_4 = arith.constant 0 : index
    %c0_5 = arith.constant 0 : index
    %7 = vector.load %arg4[%c0_4, %c0_5] : memref<64x128xbf16, #tpu.memory_space<vmem>>, vector<64x128xbf16>
    %cst_6 = arith.constant dense<0.000000e+00> : vector<64x128xf32>
    %8 = tpu.matmul %7, %6, %cst_6 {dimension_numbers = #tpu.dot_dimension_numbers<[1], [0], [0], [1], [0, 0, 1, 1], [], []>} : vector<64x128xbf16>, vector<128x128xbf16>, vector<64x128xf32> -> vector<64x128xf32>
    %c0_7 = arith.constant 0 : index
    %c0_8 = arith.constant 0 : index
    %9 = vector.load %arg5[%c0_7, %c0_8] : memref<64x1xf32, #tpu.memory_space<vmem>>, vector<64x1xf32>
    %10 = vector.broadcast %9 : vector<64x1xf32> to vector<64x128xf32>
    %11 = arith.addf %8, %10 : vector<64x128xf32>
    %12 = arith.truncf %11 : vector<64x128xf32> to vector<64x128xbf16>
    %cst_9 = arith.constant 1.000980e-02 : bf16
    %13 = vector.broadcast %cst_9 : bf16 to vector<64x128xbf16>
    %14 = arith.mulf %12, %13 : vector<64x128xbf16>
    %15 = arith.maximumf %12, %14 : vector<64x128xbf16>
    %c0_10 = arith.constant 0 : index
    %c0_11 = arith.constant 0 : index
    %16 = vector.load %arg6[%c0_10, %c0_11] : memref<32x64xbf16, #tpu.memory_space<vmem>>, vector<32x64xbf16>
    %cst_12 = arith.constant dense<0.000000e+00> : vector<32x128xf32>
    %17 = tpu.matmul %16, %15, %cst_12 {dimension_numbers = #tpu.dot_dimension_numbers<[1], [0], [0], [1], [0, 0, 1, 1], [], []>} : vector<32x64xbf16>, vector<64x128xbf16>, vector<32x128xf32> -> vector<32x128xf32>
    %c0_13 = arith.constant 0 : index
    %c0_14 = arith.constant 0 : index
    %18 = vector.load %arg7[%c0_13, %c0_14] : memref<32x1xf32, #tpu.memory_space<vmem>>, vector<32x1xf32>
    %19 = vector.broadcast %18 : vector<32x1xf32> to vector<32x128xf32>
    %20 = arith.addf %17, %19 : vector<32x128xf32>
    %21 = arith.truncf %20 : vector<32x128xf32> to vector<32x128xbf16>
    %cst_15 = arith.constant 1.000980e-02 : bf16
    %22 = vector.broadcast %cst_15 : bf16 to vector<32x128xbf16>
    %23 = arith.mulf %21, %22 : vector<32x128xbf16>
    %24 = arith.maximumf %21, %23 : vector<32x128xbf16>
    %c0_16 = arith.constant 0 : index
    %c0_17 = arith.constant 0 : index
    %25 = vector.load %arg8[%c0_16, %c0_17] : memref<32x32xbf16, #tpu.memory_space<vmem>>, vector<32x32xbf16>
    %cst_18 = arith.constant dense<0.000000e+00> : vector<32x128xf32>
    %26 = tpu.matmul %25, %24, %cst_18 {dimension_numbers = #tpu.dot_dimension_numbers<[1], [0], [0], [1], [0, 0, 1, 1], [], []>} : vector<32x32xbf16>, vector<32x128xbf16>, vector<32x128xf32> -> vector<32x128xf32>
    %c0_19 = arith.constant 0 : index
    %c0_20 = arith.constant 0 : index
    %27 = vector.load %arg9[%c0_19, %c0_20] : memref<32x1xf32, #tpu.memory_space<vmem>>, vector<32x1xf32>
    %28 = vector.broadcast %27 : vector<32x1xf32> to vector<32x128xf32>
    %29 = arith.addf %26, %28 : vector<32x128xf32>
    %30 = arith.truncf %29 : vector<32x128xf32> to vector<32x128xbf16>
    %cst_21 = arith.constant 1.000980e-02 : bf16
    %31 = vector.broadcast %cst_21 : bf16 to vector<32x128xbf16>
    %32 = arith.mulf %30, %31 : vector<32x128xbf16>
    %33 = arith.maximumf %30, %32 : vector<32x128xbf16>
    %c0_22 = arith.constant 0 : index
    %c0_23 = arith.constant 0 : index
    %34 = vector.load %arg10[%c0_22, %c0_23] : memref<2x32xbf16, #tpu.memory_space<vmem>>, vector<2x32xbf16>
    %cst_24 = arith.constant dense<0.000000e+00> : vector<2x128xf32>
    %35 = tpu.matmul %34, %33, %cst_24 {dimension_numbers = #tpu.dot_dimension_numbers<[1], [0], [0], [1], [0, 0, 1, 1], [], []>} : vector<2x32xbf16>, vector<32x128xbf16>, vector<2x128xf32> -> vector<2x128xf32>
    %c0_25 = arith.constant 0 : index
    %c0_26 = arith.constant 0 : index
    %36 = vector.load %arg11[%c0_25, %c0_26] : memref<2x1xf32, #tpu.memory_space<vmem>>, vector<2x1xf32>
    %37 = vector.broadcast %36 : vector<2x1xf32> to vector<2x128xf32>
    %38 = arith.addf %35, %37 : vector<2x128xf32>
    %39 = vector.extract_strided_slice %38 {offsets = [0, 0], sizes = [1, 128], strides = [1, 1]} : vector<2x128xf32> to vector<1x128xf32>
    %40 = vector.extract_strided_slice %38 {offsets = [1, 0], sizes = [1, 128], strides = [1, 1]} : vector<2x128xf32> to vector<1x128xf32>
    %cst_27 = arith.constant 1.000000e-10 : f32
    %41 = vector.broadcast %cst_27 : f32 to vector<1x128xf32>
    %42 = arith.maximumf %40, %41 : vector<1x128xf32>
    %c0_28 = arith.constant 0 : index
    %c0_29 = arith.constant 0 : index
    %43 = vector.load %arg2[%c0_28, %c0_29] : memref<1x128xf32, #tpu.memory_space<vmem>>, vector<1x128xf32>
    %44 = math.log %43 : vector<1x128xf32>
    %45 = arith.mulf %42, %44 : vector<1x128xf32>
    %46 = math.exp %45 : vector<1x128xf32>
    %47 = arith.mulf %39, %46 : vector<1x128xf32>
    %c0_30 = arith.constant 0 : index
    %c0_31 = arith.constant 0 : index
    %48 = vector.load %arg12[%c0_30, %c0_31] : memref<1x128xf32, #tpu.memory_space<vmem>>, vector<1x128xf32>
    tpu.vector_store %arg12[%c0_30, %c0_31], %47 {strides = array<i32>} : memref<1x128xf32, #tpu.memory_space<vmem>>, vector<1x128xf32>,
    return
  }
  func.func @transform_0(%arg0: i32) -> (i32, i32) {
    %c0_i32 = arith.constant 0 : i32
    %c0_i32_0 = arith.constant 0 : i32
    return %c0_i32, %arg0 : i32, i32
  }
  func.func @transform_1(%arg0: i32) -> (i32, i32) {
    %c0_i32 = arith.constant 0 : i32
    %c0_i32_0 = arith.constant 0 : i32
    return %c0_i32, %arg0 : i32, i32
  }
  func.func @transform_2(%arg0: i32) -> (i32, i32) {
    %c0_i32 = arith.constant 0 : i32
    %c0_i32_0 = arith.constant 0 : i32
    %c0_i32_1 = arith.constant 0 : i32
    return %c0_i32, %c0_i32_0 : i32, i32
  }
  func.func @transform_3(%arg0: i32) -> (i32, i32) {
    %c0_i32 = arith.constant 0 : i32
    %c0_i32_0 = arith.constant 0 : i32
    %c0_i32_1 = arith.constant 0 : i32
    return %c0_i32, %c0_i32_0 : i32, i32
  }
  func.func @transform_4(%arg0: i32) -> (i32, i32) {
    %c0_i32 = arith.constant 0 : i32
    %c0_i32_0 = arith.constant 0 : i32
    %c0_i32_1 = arith.constant 0 : i32
    return %c0_i32, %c0_i32_0 : i32, i32
  }
  func.func @transform_5(%arg0: i32) -> (i32, i32) {
    %c0_i32 = arith.constant 0 : i32
    %c0_i32_0 = arith.constant 0 : i32
    %c0_i32_1 = arith.constant 0 : i32
    return %c0_i32, %c0_i32_0 : i32, i32
  }
  func.func @transform_6(%arg0: i32) -> (i32, i32) {
    %c0_i32 = arith.constant 0 : i32
    %c0_i32_0 = arith.constant 0 : i32
    %c0_i32_1 = arith.constant 0 : i32
    return %c0_i32, %c0_i32_0 : i32, i32
  }
  func.func @transform_7(%arg0: i32) -> (i32, i32) {
    %c0_i32 = arith.constant 0 : i32
    %c0_i32_0 = arith.constant 0 : i32
    %c0_i32_1 = arith.constant 0 : i32
    return %c0_i32, %c0_i32_0 : i32, i32
  }
  func.func @transform_8(%arg0: i32) -> (i32, i32) {
    %c0_i32 = arith.constant 0 : i32
    %c0_i32_0 = arith.constant 0 : i32
    %c0_i32_1 = arith.constant 0 : i32
    return %c0_i32, %c0_i32_0 : i32, i32
  }
  func.func @transform_9(%arg0: i32) -> (i32, i32) {
    %c0_i32 = arith.constant 0 : i32
    %c0_i32_0 = arith.constant 0 : i32
    %c0_i32_1 = arith.constant 0 : i32
    return %c0_i32, %c0_i32_0 : i32, i32
  }
  func.func @transform_10(%arg0: i32) -> (i32, i32) {
    %c0_i32 = arith.constant 0 : i32
    %c0_i32_0 = arith.constant 0 : i32
    %c0_i32_1 = arith.constant 0 : i32
    return %c0_i32, %c0_i32_0 : i32, i32
  }
  func.func @transform_11(%arg0: i32) -> (i32, i32) {
    %c0_i32 = arith.constant 0 : i32
    %c0_i32_0 = arith.constant 0 : i32
    return %c0_i32, %arg0 : i32, i32
  }
}

</mosaic_0001>

<llo_original>
// kernel: tpu_custom_call.1
$region0: #{tpu_custom_call.1}
  #allocation0 [shape = 'u32[]', space=smem, size = 0x4, offset = 0x4, fixed_abs, tag = 'smem constant byte address 0x4 - core index']
  #allocation1 [shape = 'u32[144,128]{1,0:T(1,128)}', space=vmem, size = 0x12000, scoped, tag = 'internal scratch']
  %s0 = inlined_call_operand.vmem [shape: bf16[18,128], index: 0, kind: input, shape index: {}]
  %s1 = inlined_call_operand.vmem [shape: f32[1,128], index: 1, kind: input, shape index: {}]
  %s2 = inlined_call_operand.vmem [shape: bf16[128,18], index: 2, kind: input, shape index: {}]
  %s3 = inlined_call_operand.vmem [shape: bf16[64,128], index: 3, kind: input, shape index: {}]
  %s4 = inlined_call_operand.vmem [shape: f32[64,1], index: 4, kind: input, shape index: {}]
  %s5 = inlined_call_operand.vmem [shape: bf16[32,64], index: 5, kind: input, shape index: {}]
  %s6 = inlined_call_operand.vmem [shape: f32[32,1], index: 6, kind: input, shape index: {}]
  %s7 = inlined_call_operand.vmem [shape: bf16[32,32], index: 7, kind: input, shape index: {}]
  %s8 = inlined_call_operand.vmem [shape: f32[32,1], index: 8, kind: input, shape index: {}]
  %s9 = inlined_call_operand.vmem [shape: bf16[2,32], index: 9, kind: input, shape index: {}]
  %s10 = inlined_call_operand.vmem [shape: f32[2,1], index: 10, kind: input, shape index: {}]
  %s11 = inlined_call_operand.hbm [shape: f32[1,128], index: 11, kind: output, shape index: {}]
  %s12 = sld [smem:[#allocation0]]
  $region54: #{tpu_custom_call.1} parent=0
    _
  %s14 = ssub.s32 1, %s12
  %s15 = scalar_select 0, %s14, %s12
  $region1: #{tpu_custom_call.1} parent=0
    #allocation2 [shape = 'u8[512]{0}', space=vmem, size = 0x400, scoped, tag = 'output window, operand 0, single buffered']
    #allocation3 [shape = 's32[1]{0}', space=sflag, size = 0x4, scoped, tag = 'scoped memory for tpu_custom_call.1']
    %16 = vsyncpa [#allocation3], 0
    // Predicated region
    $region2: #{tpu_custom_call.1} parent=1 // pred_check
      _
    $region3: #{tpu_custom_call.1} parent=1 // pred_check_branch
      %18 = sbr.rel (0) target = $region5
    $region4: #{tpu_custom_call.1} parent=1 // pred_region
      _
    $region5: #{tpu_custom_call.1} parent=1 // pred_fallthru
      _
    // Predicated region
    $region6: #{tpu_custom_call.1} parent=1 // pred_check
      _
    $region7: #{tpu_custom_call.1} parent=1 // pred_check_branch
      %20 = sbr.rel (0) target = $region9
    $region8: #{tpu_custom_call.1} parent=1 // pred_region
      _
    $region9: #{tpu_custom_call.1} parent=1 // pred_fallthru
      _
    // Predicated region
    $region10: #{tpu_custom_call.1} parent=1 // pred_check
      _
    $region11: #{tpu_custom_call.1} parent=1 // pred_check_branch
      %22 = sbr.rel (0) target = $region13
    $region12: #{tpu_custom_call.1} parent=1 // pred_region
      _
    $region13: #{tpu_custom_call.1} parent=1 // pred_fallthru
      _
    // Predicated region
    $region14: #{tpu_custom_call.1} parent=1 // pred_check
      _
    $region15: #{tpu_custom_call.1} parent=1 // pred_check_branch
      %24 = sbr.rel (0) target = $region17
    $region16: #{tpu_custom_call.1} parent=1 // pred_region
      _
    $region17: #{tpu_custom_call.1} parent=1 // pred_fallthru
      _
    // Predicated region
    $region18: #{tpu_custom_call.1} parent=1 // pred_check
      _
    $region19: #{tpu_custom_call.1} parent=1 // pred_check_branch
      %26 = sbr.rel (0) target = $region21
    $region20: #{tpu_custom_call.1} parent=1 // pred_region
      _
    $region21: #{tpu_custom_call.1} parent=1 // pred_fallthru
      _
    // Predicated region
    $region22: #{tpu_custom_call.1} parent=1 // pred_check
      _
    $region23: #{tpu_custom_call.1} parent=1 // pred_check_branch
      %28 = sbr.rel (0) target = $region25
    $region24: #{tpu_custom_call.1} parent=1 // pred_region
      _
    $region25: #{tpu_custom_call.1} parent=1 // pred_fallthru
      _
    // Predicated region
    $region26: #{tpu_custom_call.1} parent=1 // pred_check
      _
    $region27: #{tpu_custom_call.1} parent=1 // pred_check_branch
      %30 = sbr.rel (0) target = $region29
    $region28: #{tpu_custom_call.1} parent=1 // pred_region
      _
    $region29: #{tpu_custom_call.1} parent=1 // pred_fallthru
      _
    // Predicated region
    $region30: #{tpu_custom_call.1} parent=1 // pred_check
      _
    $region31: #{tpu_custom_call.1} parent=1 // pred_check_branch
      %32 = sbr.rel (0) target = $region33
    $region32: #{tpu_custom_call.1} parent=1 // pred_region
      _
    $region33: #{tpu_custom_call.1} parent=1 // pred_fallthru
      _
    // Predicated region
    $region34: #{tpu_custom_call.1} parent=1 // pred_check
      _
    $region35: #{tpu_custom_call.1} parent=1 // pred_check_branch
      %34 = sbr.rel (0) target = $region37
    $region36: #{tpu_custom_call.1} parent=1 // pred_region
      _
    $region37: #{tpu_custom_call.1} parent=1 // pred_fallthru
      _
    // Predicated region
    $region38: #{tpu_custom_call.1} parent=1 // pred_check
      _
    $region39: #{tpu_custom_call.1} parent=1 // pred_check_branch
      %36 = sbr.rel (0) target = $region41
    $region40: #{tpu_custom_call.1} parent=1 // pred_region
      _
    $region41: #{tpu_custom_call.1} parent=1 // pred_fallthru
      _
    // Predicated region
    $region42: #{tpu_custom_call.1} parent=1 // pred_check
      _
    $region43: #{tpu_custom_call.1} parent=1 // pred_check_branch
      %38 = sbr.rel (0) target = $region45
    $region44: #{tpu_custom_call.1} parent=1 // pred_region
      _
    $region45: #{tpu_custom_call.1} parent=1 // pred_fallthru
      _
    %v41 = vld [vmem:[%s0] sm:$0xf]
    %v42 = vld [vmem:[%s0 + $0x4] sm:$0xf]
    %v43 = vld [vmem:[%s0 + $0x8] sm:$0x1]
    %v44 = vld [vmem:[%s2] sm:$0xf]
    %v45 = vld [vmem:[%s2 + $0x4] sm:$0xf]
    %v46 = vld [vmem:[%s2 + $0x8] sm:$0xf]
    %v47 = vld [vmem:[%s2 + $0xc] sm:$0xf]
    %v48 = vld [vmem:[%s2 + $0x10] sm:$0xf]
    %v49 = vld [vmem:[%s2 + $0x14] sm:$0xf]
    %v50 = vld [vmem:[%s2 + $0x18] sm:$0xf]
    %v51 = vld [vmem:[%s2 + $0x1c] sm:$0xf]
    %v52 = vld [vmem:[%s2 + $0x20] sm:$0xf]
    %v53 = vld [vmem:[%s2 + $0x24] sm:$0xf]
    %v54 = vld [vmem:[%s2 + $0x28] sm:$0xf]
    %v55 = vld [vmem:[%s2 + $0x2c] sm:$0xf]
    %v56 = vld [vmem:[%s2 + $0x30] sm:$0xf]
    %v57 = vld [vmem:[%s2 + $0x34] sm:$0xf]
    %v58 = vld [vmem:[%s2 + $0x38] sm:$0xf]
    %v59 = vld [vmem:[%s2 + $0x3c] sm:$0xf]
    %v76 = vunpack.c.l.b16 %v44
    %v77 = vunpack.c.l.b16 %v45
    %v78 = vunpack.c.l.b16 %v46
    %v79 = vunpack.c.l.b16 %v47
    %v80 = vunpack.c.l.b16 %v48
    %v81 = vunpack.c.l.b16 %v49
    %v82 = vunpack.c.l.b16 %v50
    %v83 = vunpack.c.l.b16 %v51
    %v84 = vunpack.c.l.b16 %v52
    %v85 = vunpack.c.l.b16 %v53
    %v86 = vunpack.c.l.b16 %v54
    %v87 = vunpack.c.l.b16 %v55
    %v88 = vunpack.c.l.b16 %v56
    %v89 = vunpack.c.l.b16 %v57
    %v90 = vunpack.c.l.b16 %v58
    %v91 = vunpack.c.l.b16 %v59
    %v92 = vpack.c.b16 %v77, %v76
    %v93 = vpack.c.b16 %v79, %v78
    %v94 = vpack.c.b16 %v81, %v80
    %v95 = vpack.c.b16 %v83, %v82
    %v96 = vpack.c.b16 %v85, %v84
    %v97 = vpack.c.b16 %v87, %v86
    %v98 = vpack.c.b16 %v89, %v88
    %v99 = vpack.c.b16 %v91, %v90
    %v103 = vunpack.c.l.b16 %v41
    %v104 = vunpack.c.l.b16 %v42
    %v105 = vunpack.c.l.b16 %v43
    %v106 = vpack.c.b16 %v104, %v103
    %v107 = vpack.c.b16 %v105, %v105
    %vm109 = vcmask 146432
    %v111 = vsel %vm109, %v92, 0
    %v114 = vsel %vm109, %v93, 0
    %v117 = vsel %vm109, %v94, 0
    %v120 = vsel %vm109, %v95, 0
    %v123 = vsel %vm109, %v96, 0
    %v126 = vsel %vm109, %v97, 0
    %v129 = vsel %vm109, %v98, 0
    %v132 = vsel %vm109, %v99, 0
    %vm134 = vcmask 1040384
    %v136 = vsel %vm134, %v107, 0
    %138 = vmatprep.subr.bf16.mxu0 0
    %139 = vmatpush1.bf16.msra.mxu0 %v106
    %140 = vmatprep.subr.bf16.mxu0 0
    %141 = vmatpush1.bf16.msra.mxu0 %v136
    %142 = vmatprep.subr.bf16.mxu0 0
    %143 = vmatpush1.bf16.msra.mxu0 0
    %144 = vmatprep.subr.bf16.mxu0 0
    %145 = vmatpush1.bf16.msra.mxu0 0
    %146 = vmatprep.subr.bf16.mxu0 0
    %147 = vmatpush1.bf16.msra.mxu0 0
    %148 = vmatprep.subr.bf16.mxu0 0
    %149 = vmatpush1.bf16.msra.mxu0 0
    %150 = vmatprep.subr.bf16.mxu0 0
    %151 = vmatpush1.bf16.msra.mxu0 0
    %152 = vmatprep.subr.bf16.mxu0 0
    %153 = vmatpush1.bf16.msra.mxu0 0
    %154 = vmatprep.subr.bf16.mxu0 0
    %155 = vmatpush1.bf16.msra.mxu0 0
    %156 = vmatprep.subr.bf16.mxu0 0
    %157 = vmatpush1.bf16.msra.mxu0 0
    %158 = vmatprep.subr.bf16.mxu0 0
    %159 = vmatpush1.bf16.msra.mxu0 0
    %160 = vmatprep.subr.bf16.mxu0 0
    %161 = vmatpush1.bf16.msra.mxu0 0
    %162 = vmatprep.subr.bf16.mxu0 0
    %163 = vmatpush1.bf16.msra.mxu0 0
    %164 = vmatprep.subr.bf16.mxu0 0
    %165 = vmatpush1.bf16.msra.mxu0 0
    %166 = vmatprep.subr.bf16.mxu0 0
    %167 = vmatpush1.bf16.msra.mxu0 0
    %168 = vmatprep.subr.bf16.mxu0 0
    %169 = vmatpush1.bf16.msra.mxu0 0
    %170 = vmatprep.mubr.bf16.mxu0 0
    %171 = vmatmul.mubr.bf16.gmra.mrb[0].mxu0 %v111
    %v172 = vpop.f32.mrb[0].mxu0
    %v173 = vadd.f32 0.0, %v172
    %v174 = vpop.f32.mrb[0].mxu0
    %v175 = vpop.f32.mrb[0].mxu0
    %v176 = vadd.f32 0.0, %v175
    %v177 = vpop.f32.mrb[0].mxu0
    %178 = vmatprep.mubr.bf16.mxu0 0
    %179 = vmatmul.mubr.bf16.gmra.mrb[0].mxu0 %v114
    %v180 = vpop.f32.mrb[0].mxu0
    %v181 = vadd.f32 0.0, %v180
    %v182 = vpop.f32.mrb[0].mxu0
    %v183 = vpop.f32.mrb[0].mxu0
    %v184 = vadd.f32 0.0, %v183
    %v185 = vpop.f32.mrb[0].mxu0
    %186 = vmatprep.mubr.bf16.mxu0 0
    %187 = vmatmul.mubr.bf16.gmra.mrb[0].mxu0 %v117
    %v188 = vpop.f32.mrb[0].mxu0
    %v189 = vadd.f32 0.0, %v188
    %v190 = vpop.f32.mrb[0].mxu0
    %v191 = vpop.f32.mrb[0].mxu0
    %v192 = vadd.f32 0.0, %v191
    %v193 = vpop.f32.mrb[0].mxu0
    %194 = vmatprep.mubr.bf16.mxu0 0
    %195 = vmatmul.mubr.bf16.gmra.mrb[0].mxu0 %v120
    %v196 = vpop.f32.mrb[0].mxu0
    %v197 = vadd.f32 0.0, %v196
    %v198 = vpop.f32.mrb[0].mxu0
    %v199 = vpop.f32.mrb[0].mxu0
    %v200 = vadd.f32 0.0, %v199
    %v201 = vpop.f32.mrb[0].mxu0
    %202 = vmatprep.mubr.bf16.mxu0 0
    %203 = vmatmul.mubr.bf16.gmra.mrb[0].mxu0 %v123
    %v204 = vpop.f32.mrb[0].mxu0
    %v205 = vadd.f32 0.0, %v204
    %v206 = vpop.f32.mrb[0].mxu0
    %v207 = vpop.f32.mrb[0].mxu0
    %v208 = vadd.f32 0.0, %v207
    %v209 = vpop.f32.mrb[0].mxu0
    %210 = vmatprep.mubr.bf16.mxu0 0
    %211 = vmatmul.mubr.bf16.gmra.mrb[0].mxu0 %v126
    %v212 = vpop.f32.mrb[0].mxu0
    %v213 = vadd.f32 0.0, %v212
    %v214 = vpop.f32.mrb[0].mxu0
    %v215 = vpop.f32.mrb[0].mxu0
    %v216 = vadd.f32 0.0, %v215
    %v217 = vpop.f32.mrb[0].mxu0
    %218 = vmatprep.mubr.bf16.mxu0 0
    %219 = vmatmul.mubr.bf16.gmra.mrb[0].mxu0 %v129
    %v220 = vpop.f32.mrb[0].mxu0
    %v221 = vadd.f32 0.0, %v220
    %v222 = vpop.f32.mrb[0].mxu0
    %v223 = vpop.f32.mrb[0].mxu0
    %v224 = vadd.f32 0.0, %v223
    %v225 = vpop.f32.mrb[0].mxu0
    %226 = vmatprep.mubr.bf16.mxu0 0
    %227 = vmatmul.mubr.bf16.gmra.mrb[0].mxu0 %v132
    %v228 = vpop.f32.mrb[0].mxu0
    %v229 = vadd.f32 0.0, %v228
    %v230 = vpop.f32.mrb[0].mxu0
    %v231 = vpop.f32.mrb[0].mxu0
    %v232 = vadd.f32 0.0, %v231
    %v233 = vpop.f32.mrb[0].mxu0
    %234 = vdwg.mxu0
    %v235 = vpack.c.bf16 %v176, %v173
    %v236 = vpack.c.bf16 %v184, %v181
    %v237 = vpack.c.bf16 %v192, %v189
    %v238 = vpack.c.bf16 %v200, %v197
    %v239 = vpack.c.bf16 %v208, %v205
    %v240 = vpack.c.bf16 %v216, %v213
    %v241 = vpack.c.bf16 %v224, %v221
    %v242 = vpack.c.bf16 %v232, %v229
    %v243 = vmul.bf16 %v235, 1009007652
    %v244 = vmul.bf16 %v236, 1009007652
    %v245 = vmul.bf16 %v237, 1009007652
    %v246 = vmul.bf16 %v238, 1009007652
    %v247 = vmul.bf16 %v239, 1009007652
    %v248 = vmul.bf16 %v240, 1009007652
    %v249 = vmul.bf16 %v241, 1009007652
    %v250 = vmul.bf16 %v242, 1009007652
    %v251 = vmax.bf16 %v235, %v243
    %v252 = vmax.bf16 %v236, %v244
    %v253 = vmax.bf16 %v237, %v245
    %v254 = vmax.bf16 %v238, %v246
    %v255 = vmax.bf16 %v239, %v247
    %v256 = vmax.bf16 %v240, %v248
    %v257 = vmax.bf16 %v241, %v249
    %v258 = vmax.bf16 %v242, %v250
    %v259 = vld [vmem:[%s3] sm:$0xf]
    %v260 = vld [vmem:[%s3 + $0x4] sm:$0xf]
    %v261 = vld [vmem:[%s3 + $0x8] sm:$0xf]
    %v262 = vld [vmem:[%s3 + $0xc] sm:$0xf]
    %v263 = vld [vmem:[%s3 + $0x10] sm:$0xf]
    %v264 = vld [vmem:[%s3 + $0x14] sm:$0xf]
    %v265 = vld [vmem:[%s3 + $0x18] sm:$0xf]
    %v266 = vld [vmem:[%s3 + $0x1c] sm:$0xf]
    %v267 = vld [vmem:[%s4] sm:$0xff]
    %v268 = vld [vmem:[%s4 + $0x8] sm:$0xff]
    %v269 = vld [vmem:[%s4 + $0x10] sm:$0xff]
    %v270 = vld [vmem:[%s4 + $0x18] sm:$0xff]
    %v271 = vld [vmem:[%s4 + $0x20] sm:$0xff]
    %v272 = vld [vmem:[%s4 + $0x28] sm:$0xff]
    %v273 = vld [vmem:[%s4 + $0x30] sm:$0xff]
    %v274 = vld [vmem:[%s4 + $0x38] sm:$0xff]
    %276 = vset.pattern.permute.xlu0 0
    %277 = vperm.xlu0 %276, %v267
    %v278 = vpop.permute.xlu0 %277
    %281 = vset.pattern.permute.xlu0 0
    %282 = vperm.xlu0 %281, %v268
    %v283 = vpop.permute.xlu0 %282
    %286 = vset.pattern.permute.xlu0 0
    %287 = vperm.xlu0 %286, %v269
    %v288 = vpop.permute.xlu0 %287
    %291 = vset.pattern.permute.xlu0 0
    %292 = vperm.xlu0 %291, %v270
    %v293 = vpop.permute.xlu0 %292
    %296 = vset.pattern.permute.xlu0 0
    %297 = vperm.xlu0 %296, %v271
    %v298 = vpop.permute.xlu0 %297
    %301 = vset.pattern.permute.xlu0 0
    %302 = vperm.xlu0 %301, %v272
    %v303 = vpop.permute.xlu0 %302
    %306 = vset.pattern.permute.xlu0 0
    %307 = vperm.xlu0 %306, %v273
    %v308 = vpop.permute.xlu0 %307
    %311 = vset.pattern.permute.xlu0 0
    %312 = vperm.xlu0 %311, %v274
    %v313 = vpop.permute.xlu0 %312
    %v323 = vunpack.c.l.b16 %v259
    %v324 = vunpack.c.l.b16 %v260
    %v325 = vunpack.c.l.b16 %v261
    %v326 = vunpack.c.l.b16 %v262
    %v327 = vunpack.c.l.b16 %v263
    %v328 = vunpack.c.l.b16 %v264
    %v329 = vunpack.c.l.b16 %v265
    %v330 = vunpack.c.l.b16 %v266
    %v331 = vpack.c.b16 %v324, %v323
    %v332 = vpack.c.b16 %v326, %v325
    %v333 = vpack.c.b16 %v328, %v327
    %v334 = vpack.c.b16 %v330, %v329
    %339 = vmatprep.subr.bf16.mxu0 0
    %340 = vmatpush1.bf16.msra.mxu0 %v251
    %341 = vmatprep.subr.bf16.mxu0 0
    %342 = vmatpush1.bf16.msra.mxu0 %v252
    %343 = vmatprep.subr.bf16.mxu0 0
    %344 = vmatpush1.bf16.msra.mxu0 %v253
    %345 = vmatprep.subr.bf16.mxu0 0
    %346 = vmatpush1.bf16.msra.mxu0 %v254
    %347 = vmatprep.subr.bf16.mxu0 0
    %348 = vmatpush1.bf16.msra.mxu0 %v255
    %349 = vmatprep.subr.bf16.mxu0 0
    %350 = vmatpush1.bf16.msra.mxu0 %v256
    %351 = vmatprep.subr.bf16.mxu0 0
    %352 = vmatpush1.bf16.msra.mxu0 %v257
    %353 = vmatprep.subr.bf16.mxu0 0
    %354 = vmatpush1.bf16.msra.mxu0 %v258
    %355 = vmatprep.subr.bf16.mxu0 0
    %356 = vmatpush1.bf16.msra.mxu0 0
    %357 = vmatprep.subr.bf16.mxu0 0
    %358 = vmatpush1.bf16.msra.mxu0 0
    %359 = vmatprep.subr.bf16.mxu0 0
    %360 = vmatpush1.bf16.msra.mxu0 0
    %361 = vmatprep.subr.bf16.mxu0 0
    %362 = vmatpush1.bf16.msra.mxu0 0
    %363 = vmatprep.subr.bf16.mxu0 0
    %364 = vmatpush1.bf16.msra.mxu0 0
    %365 = vmatprep.subr.bf16.mxu0 0
    %366 = vmatpush1.bf16.msra.mxu0 0
    %367 = vmatprep.subr.bf16.mxu0 0
    %368 = vmatpush1.bf16.msra.mxu0 0
    %369 = vmatprep.subr.bf16.mxu0 0
    %370 = vmatpush1.bf16.msra.mxu0 0
    %371 = vmatprep.mubr.bf16.mxu0 0
    %372 = vmatmul.mubr.bf16.gmra.mrb[0].mxu0 %v331
    %v373 = vpop.f32.mrb[0].mxu0
    %v374 = vadd.f32 %v278, %v373
    %v375 = vpop.f32.mrb[0].mxu0
    %v376 = vpop.f32.mrb[0].mxu0
    %v377 = vadd.f32 %v283, %v376
    %v378 = vpop.f32.mrb[0].mxu0
    %379 = vmatprep.mubr.bf16.mxu0 0
    %380 = vmatmul.mubr.bf16.gmra.mrb[0].mxu0 %v332
    %v381 = vpop.f32.mrb[0].mxu0
    %v382 = vadd.f32 %v288, %v381
    %v383 = vpop.f32.mrb[0].mxu0
    %v384 = vpop.f32.mrb[0].mxu0
    %v385 = vadd.f32 %v293, %v384
    %v386 = vpop.f32.mrb[0].mxu0
    %387 = vmatprep.mubr.bf16.mxu0 0
    %388 = vmatmul.mubr.bf16.gmra.mrb[0].mxu0 %v333
    %v389 = vpop.f32.mrb[0].mxu0
    %v390 = vadd.f32 %v298, %v389
    %v391 = vpop.f32.mrb[0].mxu0
    %v392 = vpop.f32.mrb[0].mxu0
    %v393 = vadd.f32 %v303, %v392
    %v394 = vpop.f32.mrb[0].mxu0
    %395 = vmatprep.mubr.bf16.mxu0 0
    %396 = vmatmul.mubr.bf16.gmra.mrb[0].mxu0 %v334
    %v397 = vpop.f32.mrb[0].mxu0
    %v398 = vadd.f32 %v308, %v397
    %v399 = vpop.f32.mrb[0].mxu0
    %v400 = vpop.f32.mrb[0].mxu0
    %v401 = vadd.f32 %v313, %v400
    %v402 = vpop.f32.mrb[0].mxu0
    %403 = vdwg.mxu0
    %v404 = vpack.c.bf16 %v377, %v374
    %v405 = vpack.c.bf16 %v385, %v382
    %v406 = vpack.c.bf16 %v393, %v390
    %v407 = vpack.c.bf16 %v401, %v398
    %v408 = vmul.bf16 %v404, 1009007652
    %v409 = vmul.bf16 %v405, 1009007652
    %v410 = vmul.bf16 %v406, 1009007652
    %v411 = vmul.bf16 %v407, 1009007652
    %v412 = vmax.bf16 %v404, %v408
    %v413 = vmax.bf16 %v405, %v409
    %v414 = vmax.bf16 %v406, %v410
    %v415 = vmax.bf16 %v407, %v411
    %v416 = vld [vmem:[%s5] sm:$0xf]
    %v417 = vld [vmem:[%s5 + $0x4] sm:$0xf]
    %v418 = vld [vmem:[%s5 + $0x8] sm:$0xf]
    %v419 = vld [vmem:[%s5 + $0xc] sm:$0xf]
    %v420 = vld [vmem:[%s6] sm:$0xff]
    %v421 = vld [vmem:[%s6 + $0x8] sm:$0xff]
    %v422 = vld [vmem:[%s6 + $0x10] sm:$0xff]
    %v423 = vld [vmem:[%s6 + $0x18] sm:$0xff]
    %425 = vset.pattern.permute.xlu0 0
    %426 = vperm.xlu0 %425, %v420
    %v427 = vpop.permute.xlu0 %426
    %430 = vset.pattern.permute.xlu0 0
    %431 = vperm.xlu0 %430, %v421
    %v432 = vpop.permute.xlu0 %431
    %435 = vset.pattern.permute.xlu0 0
    %436 = vperm.xlu0 %435, %v422
    %v437 = vpop.permute.xlu0 %436
    %440 = vset.pattern.permute.xlu0 0
    %441 = vperm.xlu0 %440, %v423
    %v442 = vpop.permute.xlu0 %441
    %v448 = vunpack.c.l.b16 %v416
    %v449 = vunpack.c.l.b16 %v417
    %v450 = vunpack.c.l.b16 %v418
    %v451 = vunpack.c.l.b16 %v419
    %v452 = vpack.c.b16 %v449, %v448
    %v453 = vpack.c.b16 %v451, %v450
    %vm454 = vcmask 523264
    %v456 = vsel %vm454, %v452, 0
    %v459 = vsel %vm454, %v453, 0
    %461 = vmatprep.subr.bf16.mxu0 0
    %462 = vmatpush1.bf16.msra.mxu0 %v412
    %463 = vmatprep.subr.bf16.mxu0 0
    %464 = vmatpush1.bf16.msra.mxu0 %v413
    %465 = vmatprep.subr.bf16.mxu0 0
    %466 = vmatpush1.bf16.msra.mxu0 %v414
    %467 = vmatprep.subr.bf16.mxu0 0
    %468 = vmatpush1.bf16.msra.mxu0 %v415
    %469 = vmatprep.subr.bf16.mxu0 0
    %470 = vmatpush1.bf16.msra.mxu0 0
    %471 = vmatprep.subr.bf16.mxu0 0
    %472 = vmatpush1.bf16.msra.mxu0 0
    %473 = vmatprep.subr.bf16.mxu0 0
    %474 = vmatpush1.bf16.msra.mxu0 0
    %475 = vmatprep.subr.bf16.mxu0 0
    %476 = vmatpush1.bf16.msra.mxu0 0
    %477 = vmatprep.subr.bf16.mxu0 0
    %478 = vmatpush1.bf16.msra.mxu0 0
    %479 = vmatprep.subr.bf16.mxu0 0
    %480 = vmatpush1.bf16.msra.mxu0 0
    %481 = vmatprep.subr.bf16.mxu0 0
    %482 = vmatpush1.bf16.msra.mxu0 0
    %483 = vmatprep.subr.bf16.mxu0 0
    %484 = vmatpush1.bf16.msra.mxu0 0
    %485 = vmatprep.subr.bf16.mxu0 0
    %486 = vmatpush1.bf16.msra.mxu0 0
    %487 = vmatprep.subr.bf16.mxu0 0
    %488 = vmatpush1.bf16.msra.mxu0 0
    %489 = vmatprep.subr.bf16.mxu0 0
    %490 = vmatpush1.bf16.msra.mxu0 0
    %491 = vmatprep.subr.bf16.mxu0 0
    %492 = vmatpush1.bf16.msra.mxu0 0
    %493 = vmatprep.mubr.bf16.mxu0 0
    %494 = vmatmul.mubr.bf16.gmra.mrb[0].mxu0 %v456
    %v495 = vpop.f32.mrb[0].mxu0
    %v496 = vadd.f32 %v427, %v495
    %v497 = vpop.f32.mrb[0].mxu0
    %v498 = vpop.f32.mrb[0].mxu0
    %v499 = vadd.f32 %v432, %v498
    %v500 = vpop.f32.mrb[0].mxu0
    %501 = vmatprep.mubr.bf16.mxu0 0
    %502 = vmatmul.mubr.bf16.gmra.mrb[0].mxu0 %v459
    %v503 = vpop.f32.mrb[0].mxu0
    %v504 = vadd.f32 %v437, %v503
    %v505 = vpop.f32.mrb[0].mxu0
    %v506 = vpop.f32.mrb[0].mxu0
    %v507 = vadd.f32 %v442, %v506
    %v508 = vpop.f32.mrb[0].mxu0
    %509 = vdwg.mxu0
    %v510 = vpack.c.bf16 %v499, %v496
    %v511 = vpack.c.bf16 %v507, %v504
    %v512 = vmul.bf16 %v510, 1009007652
    %v513 = vmul.bf16 %v511, 1009007652
    %v514 = vmax.bf16 %v510, %v512
    %v515 = vmax.bf16 %v511, %v513
    %v516 = vld [vmem:[%s7] sm:$0xf]
    %v517 = vld [vmem:[%s7 + $0x4] sm:$0xf]
    %v518 = vld [vmem:[%s7 + $0x8] sm:$0xf]
    %v519 = vld [vmem:[%s7 + $0xc] sm:$0xf]
    %v520 = vld [vmem:[%s8] sm:$0xff]
    %v521 = vld [vmem:[%s8 + $0x8] sm:$0xff]
    %v522 = vld [vmem:[%s8 + $0x10] sm:$0xff]
    %v523 = vld [vmem:[%s8 + $0x18] sm:$0xff]
    %525 = vset.pattern.permute.xlu0 0
    %526 = vperm.xlu0 %525, %v520
    %v527 = vpop.permute.xlu0 %526
    %530 = vset.pattern.permute.xlu0 0
    %531 = vperm.xlu0 %530, %v521
    %v532 = vpop.permute.xlu0 %531
    %535 = vset.pattern.permute.xlu0 0
    %536 = vperm.xlu0 %535, %v522
    %v537 = vpop.permute.xlu0 %536
    %540 = vset.pattern.permute.xlu0 0
    %541 = vperm.xlu0 %540, %v523
    %v542 = vpop.permute.xlu0 %541
    %v548 = vunpack.c.l.b16 %v516
    %v549 = vunpack.c.l.b16 %v517
    %v550 = vunpack.c.l.b16 %v518
    %v551 = vunpack.c.l.b16 %v519
    %v552 = vpack.c.b16 %v549, %v548
    %v553 = vpack.c.b16 %v551, %v550
    %vm554 = vcmask 261120
    %v556 = vsel %vm554, %v552, 0
    %v559 = vsel %vm554, %v553, 0
    %561 = vmatprep.subr.bf16.mxu0 0
    %562 = vmatpush1.bf16.msra.mxu0 %v514
    %563 = vmatprep.subr.bf16.mxu0 0
    %564 = vmatpush1.bf16.msra.mxu0 %v515
    %565 = vmatprep.subr.bf16.mxu0 0
    %566 = vmatpush1.bf16.msra.mxu0 0
    %567 = vmatprep.subr.bf16.mxu0 0
    %568 = vmatpush1.bf16.msra.mxu0 0
    %569 = vmatprep.subr.bf16.mxu0 0
    %570 = vmatpush1.bf16.msra.mxu0 0
    %571 = vmatprep.subr.bf16.mxu0 0
    %572 = vmatpush1.bf16.msra.mxu0 0
    %573 = vmatprep.subr.bf16.mxu0 0
    %574 = vmatpush1.bf16.msra.mxu0 0
    %575 = vmatprep.subr.bf16.mxu0 0
    %576 = vmatpush1.bf16.msra.mxu0 0
    %577 = vmatprep.subr.bf16.mxu0 0
    %578 = vmatpush1.bf16.msra.mxu0 0
    %579 = vmatprep.subr.bf16.mxu0 0
    %580 = vmatpush1.bf16.msra.mxu0 0
    %581 = vmatprep.subr.bf16.mxu0 0
    %582 = vmatpush1.bf16.msra.mxu0 0
    %583 = vmatprep.subr.bf16.mxu0 0
    %584 = vmatpush1.bf16.msra.mxu0 0
    %585 = vmatprep.subr.bf16.mxu0 0
    %586 = vmatpush1.bf16.msra.mxu0 0
    %587 = vmatprep.subr.bf16.mxu0 0
    %588 = vmatpush1.bf16.msra.mxu0 0
    %589 = vmatprep.subr.bf16.mxu0 0
    %590 = vmatpush1.bf16.msra.mxu0 0
    %591 = vmatprep.subr.bf16.mxu0 0
    %592 = vmatpush1.bf16.msra.mxu0 0
    %593 = vmatprep.mubr.bf16.mxu0 0
    %594 = vmatmul.mubr.bf16.gmra.mrb[0].mxu0 %v556
    %v595 = vpop.f32.mrb[0].mxu0
    %v596 = vadd.f32 %v527, %v595
    %v597 = vpop.f32.mrb[0].mxu0
    %v598 = vpop.f32.mrb[0].mxu0
    %v599 = vadd.f32 %v532, %v598
    %v600 = vpop.f32.mrb[0].mxu0
    %601 = vmatprep.mubr.bf16.mxu0 0
    %602 = vmatmul.mubr.bf16.gmra.mrb[0].mxu0 %v559
    %v603 = vpop.f32.mrb[0].mxu0
    %v604 = vadd.f32 %v537, %v603
    %v605 = vpop.f32.mrb[0].mxu0
    %v606 = vpop.f32.mrb[0].mxu0
    %v607 = vadd.f32 %v542, %v606
    %v608 = vpop.f32.mrb[0].mxu0
    %609 = vdwg.mxu0
    %v610 = vpack.c.bf16 %v599, %v596
    %v611 = vpack.c.bf16 %v607, %v604
    %v612 = vmul.bf16 %v610, 1009007652
    %v613 = vmul.bf16 %v611, 1009007652
    %v614 = vmax.bf16 %v610, %v612
    %v615 = vmax.bf16 %v611, %v613
    %v616 = vld [vmem:[%s9] sm:$0x1]
    %v617 = vld [vmem:[%s10] sm:$0x3]
    %619 = vset.pattern.permute.xlu0 0
    %620 = vperm.xlu0 %619, %v617
    %v621 = vpop.permute.xlu0 %620
    %v624 = vsel %vm554, %v616, 0
    %626 = vmatprep.subr.bf16.mxu0 0
    %627 = vmatpush1.bf16.msra.mxu0 %v614
    %628 = vmatprep.subr.bf16.mxu0 0
    %629 = vmatpush1.bf16.msra.mxu0 %v615
    %630 = vmatprep.subr.bf16.mxu0 0
    %631 = vmatpush1.bf16.msra.mxu0 0
    %632 = vmatprep.subr.bf16.mxu0 0
    %633 = vmatpush1.bf16.msra.mxu0 0
    %634 = vmatprep.subr.bf16.mxu0 0
    %635 = vmatpush1.bf16.msra.mxu0 0
    %636 = vmatprep.subr.bf16.mxu0 0
    %637 = vmatpush1.bf16.msra.mxu0 0
    %638 = vmatprep.subr.bf16.mxu0 0
    %639 = vmatpush1.bf16.msra.mxu0 0
    %640 = vmatprep.subr.bf16.mxu0 0
    %641 = vmatpush1.bf16.msra.mxu0 0
    %642 = vmatprep.subr.bf16.mxu0 0
    %643 = vmatpush1.bf16.msra.mxu0 0
    %644 = vmatprep.subr.bf16.mxu0 0
    %645 = vmatpush1.bf16.msra.mxu0 0
    %646 = vmatprep.subr.bf16.mxu0 0
    %647 = vmatpush1.bf16.msra.mxu0 0
    %648 = vmatprep.subr.bf16.mxu0 0
    %649 = vmatpush1.bf16.msra.mxu0 0
    %650 = vmatprep.subr.bf16.mxu0 0
    %651 = vmatpush1.bf16.msra.mxu0 0
    %652 = vmatprep.subr.bf16.mxu0 0
    %653 = vmatpush1.bf16.msra.mxu0 0
    %654 = vmatprep.subr.bf16.mxu0 0
    %655 = vmatpush1.bf16.msra.mxu0 0
    %656 = vmatprep.subr.bf16.mxu0 0
    %657 = vmatpush1.bf16.msra.mxu0 0
    %658 = vmatprep.mubr.bf16.mxu0 0
    %659 = vmatmul.mubr.bf16.gmra.mrb[0].mxu0 %v624
    %v660 = vpop.f32.mrb[0].mxu0
    %v661 = vadd.f32 %v621, %v660
    %v662 = vpop.f32.mrb[0].mxu0
    %v663 = vpop.f32.mrb[0].mxu0
    %v664 = vpop.f32.mrb[0].mxu0
    %665 = vdwg.mxu0
    %v666 = vmax.f32 %v661, 1e-10
    %v667 = vld [vmem:[%s1] sm:$0x1]
    %v668 = vlog2.pop %v667
    %v669 = vmul.f32 %v668, 0.6931472
    %v671 = vlaneseq
    %v672 = vshrl.u32 %v671, 7
    %v673 = vsub.s32 0, %v672
    %v674 = vrot.slane %v669, %v673
    %v676 = vmul.f32 %v666, %v674
    %v677 = vmul.f32 %v676, 1.442695
    %v678 = vpow.pop %v677
    %v680 = vrot.slane %v678, 1
    %v682 = vmul.f32 %v661, %v680
    %683 = vst [vmem:[#allocation2] sm:$0x1] %v682
    // Predicated region
    $region46: #{tpu_custom_call.1} parent=1 // pred_check
      _
    $region47: #{tpu_custom_call.1} parent=1 // pred_check_branch
      %685 = sbr.rel (0) target = $region49
    $region48: #{tpu_custom_call.1} parent=1 // pred_region
      %s687 = ssub.s32 16, 16
      %688 = vsyncadd [#allocation3], %s687
      %s690 = sshll.u32 [#allocation2], 4
      %s691 = int_to_ptr.vmem [resolvable:$true] %s690
      %693 = dma.vmem_to_hbm [thread:$0]  %s691, 16, %s11, [#allocation3]
    $region49: #{tpu_custom_call.1} parent=1 // pred_fallthru
      _
    // Predicated region
    $region50: #{tpu_custom_call.1} parent=1 // pred_check
      _
    $region51: #{tpu_custom_call.1} parent=1 // pred_check_branch
      %695 = sbr.rel (0) target = $region53
    $region52: #{tpu_custom_call.1} parent=1 // pred_region
      %696 = dma.done [#allocation3], 16
    $region53: #{tpu_custom_call.1} parent=1 // pred_fallthru
      _
    %697 = vsyncpa [#allocation3], 1

</llo_original>
